<compile_context>
chip_gen: v7x
topology: tpu7x:2x2x1
jax: 0.10.0
libtpu: 0.0.40
codegen_flags: <defaults>
</compile_context>

<pallas_src>
import functools

import jax
import jax.numpy as jnp
from jax import lax
from jax.experimental import pallas as pl
from jax.experimental.pallas import tpu as pltpu


def _round_up(x, m):
    return (x + m - 1) // m * m


def _conv_bn_relu_kernel(x_ref, w_ref, scale_ref, bias_ref, o_ref, *,
                         sh, sw, kh_kw, cin, th, wo):
    # x_ref     : (Hp, Wp, Cin)       bf16 whole padded image (this batch elem)
    # w_ref     : (K_pad, CO_BLK)     bf16 im2col weights (tap-major, ch-minor)
    # scale_ref : (1, CO_BLK)         f32 folded BN scale
    # bias_ref  : (1, CO_BLK)         f32 folded BN(+conv-bias) bias
    # o_ref     : (CO_STORE, TH*Wo)   f32 NCHW output block (lane-dense)
    KH, KW = kh_kw
    K_pad, CO = w_ref.shape
    CO_STORE = o_ref.shape[0]
    hi = pl.program_id(2)

    th_in = (th - 1) * sh + KH
    row0 = pl.multiple_of(hi * (th * sh), th * sh)
    xw = x_ref[pl.ds(row0, th_in), :, :]                 # (TH_in, Wp, Cin) bf16

    def tap(kh, kw):                                     # (TH, Wo, Cin) window
        return xw[kh:kh + (th - 1) * sh + 1:sh,
                  kw:kw + (wo - 1) * sw + 1:sw, :]

    if cin < 128:
        # Fused im2col: one lane-dense K = KH*KW*Cin (padded to K_pad) matmul.
        taps = [tap(kh, kw) for kh in range(KH) for kw in range(KW)]
        k = KH * KW * cin
        if K_pad > k:
            taps.append(jnp.zeros((th, wo, K_pad - k), xw.dtype))
        patch = jnp.concatenate(taps, axis=-1)           # (TH, Wo, K_pad)
        acc = jnp.dot(patch.reshape(th * wo, K_pad), w_ref[...],
                      preferred_element_type=jnp.float32)
    else:
        # Large Cin: per-tap K = Cin matmuls already keep the MXU K-depth
        # busy and avoid materialising a KH*KW*Cin-wide patch.
        acc = jnp.zeros((th * wo, CO), jnp.float32)
        for kh in range(KH):
            for kw in range(KW):
                base = (kh * KW + kw) * cin
                acc = acc + jnp.dot(tap(kh, kw).reshape(th * wo, cin),
                                    w_ref[base:base + cin, :],
                                    preferred_element_type=jnp.float32)

    out = jnp.maximum(acc * scale_ref[...] + bias_ref[...], 0.0)  # (M, CO) f32
    # Emit NCHW directly; only the real Cout channels of this block are stored.
    o_ref[...] = out.T[:CO_STORE].astype(o_ref.dtype)


def conv_bn_relu(x_nchw, weight_oihw, conv_bias, gamma, beta,
                 running_mean, running_var, *,
                 stride=(1, 1), padding=(0, 0), eps=1e-5, target_m=128):
    """Forward of Conv(nn.Conv2d -> nn.BatchNorm2d(eval) -> ReLU).

    x_nchw: (N, Cin, H, W); returns (N, Cout, Ho, Wo), same as PyTorch.
    """
    N, Cin, H, W = x_nchw.shape
    Cout, _, KH, KW = weight_oihw.shape
    sh, sw = stride
    ph, pw = padding
    Ho = (H + 2 * ph - KH) // sh + 1
    Wo = (W + 2 * pw - KW) // sw + 1

    # ---- tile geometry -----------------------------------------------------
    # TH divides Ho (no padding / post-slice) and TH*Wo is a multiple of 128
    # (or the whole plane), giving lane-dense output stores; TH*Wo ~ target_m
    # keeps the f32 accumulator small (v5e/v6e MRF path: ~16 vregs).
    valid_th = [t for t in range(1, Ho + 1)
                if Ho % t == 0 and ((t * Wo) % 128 == 0 or t == Ho)]
    TH = min(valid_th, key=lambda t: (abs(t * Wo - target_m), t))
    n_ho = Ho // TH
    TH_in = (TH - 1) * sh + KH

    K = KH * KW * Cin
    K_pad = _round_up(K, 128)
    Cout_p = _round_up(Cout, 128)
    if Cout_p <= 256:
        CO_BLK = Cout_p          # whole-Cout matmul N; weights stay resident
        CO_STORE = Cout          # store only the real channels
    else:
        CO_BLK = 256 if Cout_p % 256 == 0 else 128
        CO_STORE = CO_BLK
    n_co = Cout_p // CO_BLK
    out_ch = CO_STORE * n_co     # == Cout when n_co == 1

    # ---- wrapper-side layout (single cheap pass; no halo / gather copy) ----
    x_nhwc = jnp.transpose(x_nchw, (0, 2, 3, 1)).astype(jnp.bfloat16)
    Hp, Wp = H + 2 * ph, W + 2 * pw
    h_need = (n_ho * TH - 1) * sh + KH
    pad_bot = max(0, h_need - Hp)
    x_pad = jnp.pad(x_nhwc, ((0, 0), (ph, ph + pad_bot), (pw, pw), (0, 0)))
    Hp_k = Hp + pad_bot

    # weights -> (K_pad, Cout_p) im2col layout (tap-major, channel-minor),
    # matching the kernel's patch ordering.
    w2d = jnp.transpose(weight_oihw, (2, 3, 1, 0)).reshape(K, Cout)
    w2d = jnp.pad(w2d, ((0, K_pad - K), (0, Cout_p - Cout))).astype(jnp.bfloat16)

    if conv_bias is None:
        conv_bias = jnp.zeros((Cout,), jnp.float32)
    scale = (gamma / jnp.sqrt(running_var + eps)).astype(jnp.float32)
    bias = (beta + (conv_bias - running_mean) * scale).astype(jnp.float32)
    scale2d = jnp.pad(scale, (0, Cout_p - Cout)).reshape(1, Cout_p)
    bias2d = jnp.pad(bias, (0, Cout_p - Cout)).reshape(1, Cout_p)

    kernel = functools.partial(_conv_bn_relu_kernel, sh=sh, sw=sw,
                               kh_kw=(KH, KW), cin=Cin, th=TH, wo=Wo)

    flops = 2 * N * Ho * Wo * Cout * KH * KW * Cin
    bytes_accessed = (n_co * x_pad.size * 2 + w2d.size * 2
                      + scale2d.size * 4 + bias2d.size * 4
                      + N * out_ch * Ho * Wo * 4)

    out = pl.pallas_call(
        kernel,
        out_shape=jax.ShapeDtypeStruct((N, out_ch, Ho * Wo), jnp.float32),
        grid_spec=pltpu.PrefetchScalarGridSpec(
            num_scalar_prefetch=0,
            # co outermost: each weight block is DMA'd once and reused across
            # every (batch, row-tile) step; the (small-Cin) image is re-read
            # at most n_co (usually 1) times.
            grid=(n_co, N, n_ho),
            in_specs=[
                # whole padded image of this batch element; index constant in
                # co/hi -> Pallas keeps it resident (no halo copy, no re-DMA).
                pl.BlockSpec((None, Hp_k, Wp, Cin),
                             lambda co, n, hi: (n, 0, 0, 0)),
                pl.BlockSpec((K_pad, CO_BLK), lambda co, n, hi: (0, co)),
                pl.BlockSpec((1, CO_BLK), lambda co, n, hi: (0, co)),
                pl.BlockSpec((1, CO_BLK), lambda co, n, hi: (0, co)),
            ],
            out_specs=pl.BlockSpec((None, CO_STORE, TH * Wo),
                                   lambda co, n, hi: (n, co, hi)),
        ),
        compiler_params=pltpu.CompilerParams(
            # Independent output blocks -> all axes parallel (2-TC sharding on
            # v7x, deeper pipelining on v5e/v6e).
            dimension_semantics=("parallel", "parallel", "parallel"),
            # Small, explicitly budgeted tiles; 32 MiB fits every generation
            # (incl. v7x 64 MiB physical) with double-buffer headroom.
            vmem_limit_bytes=32 * 1024 * 1024,
        ),
        cost_estimate=pl.CostEstimate(flops=flops, transcendentals=0,
                                      bytes_accessed=bytes_accessed),
    )(x_pad, w2d, scale2d, bias2d)

    if out_ch != Cout:            # only possible for Cout > 256 and unaligned
        out = out[:, :Cout]
    return out.reshape(N, Cout, Ho, Wo)   # free metadata reshape (NCHW already)


def _reference(x_nchw, weight_oihw, conv_bias, gamma, beta,
               running_mean, running_var, *, stride, padding, eps=1e-5):
    y = lax.conv_general_dilated(
        x_nchw.astype(jnp.float32), weight_oihw.astype(jnp.float32),
        window_strides=stride,
        padding=[(padding[0], padding[0]), (padding[1], padding[1])],
        dimension_numbers=("NCHW", "OIHW", "NCHW"))
    y = y + conv_bias[None, :, None, None]
    y = (y - running_mean[None, :, None, None]) / jnp.sqrt(
        running_var[None, :, None, None] + eps)
    y = y * gamma[None, :, None, None] + beta[None, :, None, None]
    return jnp.maximum(y, 0.0)


if __name__ == "__main__":
    # Small deterministic example: Conv(4 -> 8, kernel 3x3, stride 1, pad 1)
    N, Cin, H, W = 2, 4, 16, 16
    Cout, KH, KW = 8, 3, 3
    stride, padding = (1, 1), (1, 1)

    key = jax.random.PRNGKey(0)
    kx, kw_, kb, kg, kbeta, km, kv = jax.random.split(key, 7)
    x = jax.random.normal(kx, (N, Cin, H, W), jnp.float32)
    weight = jax.random.normal(kw_, (Cout, Cin, KH, KW), jnp.float32) * 0.1
    conv_bias = jax.random.normal(kb, (Cout,), jnp.float32) * 0.1
    gamma = 1.0 + 0.1 * jax.random.normal(kg, (Cout,), jnp.float32)
    beta = 0.1 * jax.random.normal(kbeta, (Cout,), jnp.float32)
    running_mean = 0.1 * jax.random.normal(km, (Cout,), jnp.float32)
    running_var = 1.0 + 0.1 * jax.random.uniform(kv, (Cout,), jnp.float32)

    out = conv_bn_relu(x, weight, conv_bias, gamma, beta,
                       running_mean, running_var,
                       stride=stride, padding=padding)
    out = jax.block_until_ready(out)

    # Reference computed with the same bf16-quantized conv operands the MXU
    # sees (f32 accumulation / epilogue in both paths).
    xq = x.astype(jnp.bfloat16).astype(jnp.float32)
    wq = weight.astype(jnp.bfloat16).astype(jnp.float32)
    ref = _reference(xq, wq, conv_bias, gamma, beta, running_mean,
                     running_var, stride=stride, padding=padding)
    assert out.shape == (N, Cout, H, W)
    assert jnp.allclose(out, ref, atol=1e-3, rtol=1e-3), "mismatch vs reference"
    print("KERNEL_OK")
</pallas_src>

<mosaic_0001>
module attributes {stable_mosaic.version = 11 : i64} {
  func.func @_conv_bn_relu_kernel(%arg0: i32, %arg1: i32, %arg2: i32, %arg3: memref<1x18x18x4xbf16, #tpu.memory_space<vmem>>, %arg4: memref<128x128xbf16, #tpu.memory_space<vmem>>, %arg5: memref<1x128xf32, #tpu.memory_space<vmem>>, %arg6: memref<1x128xf32, #tpu.memory_space<vmem>>, %arg7: memref<1x8x128xf32, #tpu.memory_space<vmem>>) attributes {dimension_semantics = [#tpu.dimension_semantics<parallel>, #tpu.dimension_semantics<parallel>, #tpu.dimension_semantics<parallel>], iteration_bounds = array<i64: 1, 2, 2>, scalar_prefetch = 0 : i64, scratch_operands = 0 : i64, tpu.core_type = #tpu.core_type<tc>, window_params = [{transform_indices = @transform_0, window_bounds = array<i64: 1, 18, 18, 4>}, {transform_indices = @transform_1, window_bounds = array<i64: 128, 128>}, {transform_indices = @transform_2, window_bounds = array<i64: 1, 128>}, {transform_indices = @transform_3, window_bounds = array<i64: 1, 128>}, {transform_indices = @transform_4, window_bounds = array<i64: 1, 8, 128>}]} {
    %c8_i32 = arith.constant 8 : i32
    %0 = arith.muli %arg2, %c8_i32 : i32
    %1 = tpu.assume_multiple %0, 8 : i32
    %c0 = arith.constant 0 : index
    %2 = arith.index_cast %1 : i32 to index
    %c0_0 = arith.constant 0 : index
    %c0_1 = arith.constant 0 : index
    %3 = vector.load %arg3[%c0, %2, %c0_0, %c0_1] : memref<1x18x18x4xbf16, #tpu.memory_space<vmem>>, vector<1x10x18x4xbf16>
    %4 = vector.shape_cast %3 : vector<1x10x18x4xbf16> to vector<10x18x4xbf16>
    %5 = vector.extract_strided_slice %4 {offsets = [0, 0, 0], sizes = [8, 16, 4], strides = [1, 1, 1]} : vector<10x18x4xbf16> to vector<8x16x4xbf16>
    %6 = vector.extract_strided_slice %4 {offsets = [0, 1, 0], sizes = [8, 16, 4], strides = [1, 1, 1]} : vector<10x18x4xbf16> to vector<8x16x4xbf16>
    %7 = vector.extract_strided_slice %4 {offsets = [0, 2, 0], sizes = [8, 16, 4], strides = [1, 1, 1]} : vector<10x18x4xbf16> to vector<8x16x4xbf16>
    %8 = vector.extract_strided_slice %4 {offsets = [1, 0, 0], sizes = [8, 16, 4], strides = [1, 1, 1]} : vector<10x18x4xbf16> to vector<8x16x4xbf16>
    %9 = vector.extract_strided_slice %4 {offsets = [1, 1, 0], sizes = [8, 16, 4], strides = [1, 1, 1]} : vector<10x18x4xbf16> to vector<8x16x4xbf16>
    %10 = vector.extract_strided_slice %4 {offsets = [1, 2, 0], sizes = [8, 16, 4], strides = [1, 1, 1]} : vector<10x18x4xbf16> to vector<8x16x4xbf16>
    %11 = vector.extract_strided_slice %4 {offsets = [2, 0, 0], sizes = [8, 16, 4], strides = [1, 1, 1]} : vector<10x18x4xbf16> to vector<8x16x4xbf16>
    %12 = vector.extract_strided_slice %4 {offsets = [2, 1, 0], sizes = [8, 16, 4], strides = [1, 1, 1]} : vector<10x18x4xbf16> to vector<8x16x4xbf16>
    %13 = vector.extract_strided_slice %4 {offsets = [2, 2, 0], sizes = [8, 16, 4], strides = [1, 1, 1]} : vector<10x18x4xbf16> to vector<8x16x4xbf16>
    %cst = arith.constant 0.000000e+00 : bf16
    %14 = vector.broadcast %cst : bf16 to vector<8x16x92xbf16>
    %15 = tpu.concatenate %5, %6, %7, %8, %9, %10, %11, %12, %13, %14 in 2 : vector<8x16x4xbf16>, vector<8x16x4xbf16>, vector<8x16x4xbf16>, vector<8x16x4xbf16>, vector<8x16x4xbf16>, vector<8x16x4xbf16>, vector<8x16x4xbf16>, vector<8x16x4xbf16>, vector<8x16x4xbf16>, vector<8x16x92xbf16> -> vector<8x16x128xbf16>
    %16 = vector.shape_cast %15 : vector<8x16x128xbf16> to vector<128x128xbf16>
    %c0_2 = arith.constant 0 : index
    %c0_3 = arith.constant 0 : index
    %17 = vector.load %arg4[%c0_2, %c0_3] : memref<128x128xbf16, #tpu.memory_space<vmem>>, vector<128x128xbf16>
    %cst_4 = arith.constant dense<0.000000e+00> : vector<128x128xf32>
    %18 = tpu.matmul %16, %17, %cst_4 {dimension_numbers = #tpu.dot_dimension_numbers<[1], [0], [0], [1], [0, 0, 1, 1], [], []>} : vector<128x128xbf16>, vector<128x128xbf16>, vector<128x128xf32> -> vector<128x128xf32>
    %c0_5 = arith.constant 0 : index
    %c0_6 = arith.constant 0 : index
    %19 = vector.load %arg5[%c0_5, %c0_6] : memref<1x128xf32, #tpu.memory_space<vmem>>, vector<1x128xf32>
    %20 = vector.broadcast %19 : vector<1x128xf32> to vector<128x128xf32>
    %21 = arith.mulf %18, %20 : vector<128x128xf32>
    %c0_7 = arith.constant 0 : index
    %c0_8 = arith.constant 0 : index
    %22 = vector.load %arg6[%c0_7, %c0_8] : memref<1x128xf32, #tpu.memory_space<vmem>>, vector<1x128xf32>
    %23 = vector.broadcast %22 : vector<1x128xf32> to vector<128x128xf32>
    %24 = arith.addf %21, %23 : vector<128x128xf32>
    %cst_9 = arith.constant 0.000000e+00 : f32
    %25 = vector.broadcast %cst_9 : f32 to vector<128x128xf32>
    %26 = arith.maximumf %24, %25 : vector<128x128xf32>
    %27 = tpu.transpose %26, [1, 0] : vector<128x128xf32> -> vector<128x128xf32>
    %28 = vector.extract_strided_slice %27 {offsets = [0, 0], sizes = [8, 128], strides = [1, 1]} : vector<128x128xf32> to vector<8x128xf32>
    %c0_10 = arith.constant 0 : index
    %c0_11 = arith.constant 0 : index
    %c0_12 = arith.constant 0 : index
    %29 = vector.load %arg7[%c0_10, %c0_11, %c0_12] : memref<1x8x128xf32, #tpu.memory_space<vmem>>, vector<1x8x128xf32>
    %30 = vector.shape_cast %29 : vector<1x8x128xf32> to vector<8x128xf32>
    %31 = vector.shape_cast %28 : vector<8x128xf32> to vector<1x8x128xf32>
    tpu.vector_store %arg7[%c0_10, %c0_11, %c0_12], %31 {strides = array<i32>} : memref<1x8x128xf32, #tpu.memory_space<vmem>>, vector<1x8x128xf32>,
    return
  }
  func.func @transform_0(%arg0: i32, %arg1: i32, %arg2: i32) -> (i32, i32, i32, i32) {
    %c0_i32 = arith.constant 0 : i32
    %c0_i32_0 = arith.constant 0 : i32
    %c0_i32_1 = arith.constant 0 : i32
    %c0_i32_2 = arith.constant 0 : i32
    return %arg1, %c0_i32, %c0_i32_0, %c0_i32_1 : i32, i32, i32, i32
  }
  func.func @transform_1(%arg0: i32, %arg1: i32, %arg2: i32) -> (i32, i32) {
    %c0_i32 = arith.constant 0 : i32
    %c0_i32_0 = arith.constant 0 : i32
    return %c0_i32, %arg0 : i32, i32
  }
  func.func @transform_2(%arg0: i32, %arg1: i32, %arg2: i32) -> (i32, i32) {
    %c0_i32 = arith.constant 0 : i32
    %c0_i32_0 = arith.constant 0 : i32
    return %c0_i32, %arg0 : i32, i32
  }
  func.func @transform_3(%arg0: i32, %arg1: i32, %arg2: i32) -> (i32, i32) {
    %c0_i32 = arith.constant 0 : i32
    %c0_i32_0 = arith.constant 0 : i32
    return %c0_i32, %arg0 : i32, i32
  }
  func.func @transform_4(%arg0: i32, %arg1: i32, %arg2: i32) -> (i32, i32, i32) {
    %c0_i32 = arith.constant 0 : i32
    return %arg1, %arg0, %arg2 : i32, i32, i32
  }
}

</mosaic_0001>

<llo_original>
// kernel: tpu_custom_call.1
$region0: #{tpu_custom_call.1}
  #allocation0 [shape = 'u32[]', space=smem, size = 0x4, offset = 0x4, fixed_abs, tag = 'smem constant byte address 0x4 - core index']
  #allocation1 [shape = 'u32[144,128]{1,0:T(1,128)}', space=vmem, size = 0x12000, scoped, tag = 'internal scratch']
  %s0 = inlined_call_operand.vmem [shape: bf16[2,18,18,4], index: 0, kind: input, shape index: {}]
  %s1 = inlined_call_operand.vmem [shape: bf16[128,128], index: 1, kind: input, shape index: {}]
  %s2 = inlined_call_operand.vmem [shape: f32[1,128], index: 2, kind: input, shape index: {}]
  %s3 = inlined_call_operand.vmem [shape: f32[1,128], index: 3, kind: input, shape index: {}]
  %s4 = inlined_call_operand.hbm [shape: f32[2,8,256], index: 4, kind: output, shape index: {}]
  %s5 = sld [smem:[#allocation0]]
  $region49: #{tpu_custom_call.1} parent=0
    _
  %s7 = ssub.s32 1, %s5
  %s8 = scalar_select 0, %s7, %s5
  $region1: #{tpu_custom_call.1} parent=0
    #allocation2 [shape = 'u8[8192]{0}', space=vmem, size = 0x2000, scoped, tag = 'output window, operand 0']
    #allocation3 [shape = 's32[2]{0}', space=sflag, size = 0x8, scoped, tag = 'scoped memory for tpu_custom_call.1']
    %9 = vsyncpa [#allocation3], 0
    %s10 = scalar_lea.sflag [#allocation3], 1
    %11 = vsyncpa %s10, 0
    loop: start=0, step=1, limit=6
    $region2: #{tpu_custom_call.1} parent=1 // loop_pre_header
      _
    $region3: #{tpu_custom_call.1} parent=1 // loop_header
      %s13 = sphi 0, %s17
      %p14 = scmp.ge.s32.totalorder %s13, 6
      %s20 = sphi 0, %s39
      %s21 = sphi 0, %s35
      %s22 = sphi 0, %s31
      %s23 = sphi 0, %s20
      %s24 = sphi 0, %s21
      %s25 = sphi 0, %s22
      %s26 = sphi 0, %s23
      %s27 = sphi 0, %s24
      %s28 = sphi 0, %s25
      %s42 = sphi 0, %s44
      %s45 = sphi 0, %s42
      %s46 = sphi 0, %s45
      %s62 = sphi 0, %s46
      %s68 = sphi 0, %s70
      %s71 = sphi 0, %s68
      %s72 = sphi 0, %s71
      %s88 = sphi 0, %s72
      %s94 = sphi 0, %s96
      %s97 = sphi 0, %s94
      %s98 = sphi 0, %s97
      %s114 = sphi 0, %s98
      %s120 = sphi 0, %s122
      %s123 = sphi 0, %s120
      %s124 = sphi 0, %s123
      %s140 = sphi 0, %s124
      %s150 = sphi 0, %s152
      %s153 = sphi 0, %s150
      %s154 = sphi 0, %s153
      %s170 = sphi 0, %s154
    $region4: #{tpu_custom_call.1} parent=1 // loop_header_branch
      %16 = sbr.rel (%p14) target = $region8
    $region5: #{tpu_custom_call.1} parent=1 // loop_body
      %s18 = ssub.s32 %s13, 1
      %s19 = ssub.s32 %s13, 2
      %s29 = sadd.s32 1, %s22
      %p30 = scmp.ge.s32.totalorder %s29, 2
      %s31 = scalar_select %p30, 0, %s29
      %s32 = sadd.s32 1, %s21
      %s33 = scalar_select %p30, %s32, %s21
      %p34 = scmp.ge.s32.totalorder %s33, 2
      %s35 = scalar_select %p34, 0, %s33
      %s36 = sadd.s32 1, %s20
      %s37 = scalar_select %p34, %s36, %s20
      %p38 = scmp.ge.s32.totalorder %s37, 1
      %s39 = scalar_select %p38, 0, %s37
      %s40 = ssub.s32 %s21, %s35
      %p41 = scmp.eq.s32.totalorder %s40, 0
      %s43 = sadd.s32 %s42, 1
      %s44 = scalar_select %p41, %s42, %s43
      %p47 = pneg %p41
      %p48 = scmp.eq.s32.totalorder %s13, 3
      %p49 = por %p47, %p48
      %p50 = scmp.ne.s32.totalorder %s42, %s45
      %p51 = scmp.eq.s32.totalorder %s13, 0
      %p52 = por %p50, %p51
      %p53 = scmp.ne.s32.totalorder %s42, %s45
      %p54 = scmp.eq.s32.totalorder %s18, 3
      %p55 = por %p53, %p54
      %p56 = scmp.ne.s32.totalorder %s45, %s46
      %p57 = scmp.eq.s32.totalorder %s18, 0
      %p58 = por %p56, %p57
      %p59 = scmp.ne.s32.totalorder %s45, %s46
      %p60 = scmp.eq.s32.totalorder %s19, 3
      %p61 = por %p59, %p60
      %p63 = scmp.ne.s32.totalorder %s46, %s62
      %p64 = scmp.eq.s32.totalorder %s19, 0
      %p65 = por %p63, %p64
      %s66 = ssub.s32 %s20, %s39
      %p67 = scmp.eq.s32.totalorder %s66, 0
      %s69 = sadd.s32 %s68, 1
      %s70 = scalar_select %p67, %s68, %s69
      %p73 = pneg %p67
      %p74 = scmp.eq.s32.totalorder %s13, 3
      %p75 = por %p73, %p74
      %p76 = scmp.ne.s32.totalorder %s68, %s71
      %p77 = scmp.eq.s32.totalorder %s13, 0
      %p78 = por %p76, %p77
      %p79 = scmp.ne.s32.totalorder %s68, %s71
      %p80 = scmp.eq.s32.totalorder %s18, 3
      %p81 = por %p79, %p80
      %p82 = scmp.ne.s32.totalorder %s71, %s72
      %p83 = scmp.eq.s32.totalorder %s18, 0
      %p84 = por %p82, %p83
      %p85 = scmp.ne.s32.totalorder %s71, %s72
      %p86 = scmp.eq.s32.totalorder %s19, 3
      %p87 = por %p85, %p86
      %p89 = scmp.ne.s32.totalorder %s72, %s88
      %p90 = scmp.eq.s32.totalorder %s19, 0
      %p91 = por %p89, %p90
      %s92 = ssub.s32 %s20, %s39
      %p93 = scmp.eq.s32.totalorder %s92, 0
      %s95 = sadd.s32 %s94, 1
      %s96 = scalar_select %p93, %s94, %s95
      %p99 = pneg %p93
      %p100 = scmp.eq.s32.totalorder %s13, 3
      %p101 = por %p99, %p100
      %p102 = scmp.ne.s32.totalorder %s94, %s97
      %p103 = scmp.eq.s32.totalorder %s13, 0
      %p104 = por %p102, %p103
      %p105 = scmp.ne.s32.totalorder %s94, %s97
      %p106 = scmp.eq.s32.totalorder %s18, 3
      %p107 = por %p105, %p106
      %p108 = scmp.ne.s32.totalorder %s97, %s98
      %p109 = scmp.eq.s32.totalorder %s18, 0
      %p110 = por %p108, %p109
      %p111 = scmp.ne.s32.totalorder %s97, %s98
      %p112 = scmp.eq.s32.totalorder %s19, 3
      %p113 = por %p111, %p112
      %p115 = scmp.ne.s32.totalorder %s98, %s114
      %p116 = scmp.eq.s32.totalorder %s19, 0
      %p117 = por %p115, %p116
      %s118 = ssub.s32 %s20, %s39
      %p119 = scmp.eq.s32.totalorder %s118, 0
      %s121 = sadd.s32 %s120, 1
      %s122 = scalar_select %p119, %s120, %s121
      %p125 = pneg %p119
      %p126 = scmp.eq.s32.totalorder %s13, 3
      %p127 = por %p125, %p126
      %p128 = scmp.ne.s32.totalorder %s120, %s123
      %p129 = scmp.eq.s32.totalorder %s13, 0
      %p130 = por %p128, %p129
      %p131 = scmp.ne.s32.totalorder %s120, %s123
      %p132 = scmp.eq.s32.totalorder %s18, 3
      %p133 = por %p131, %p132
      %p134 = scmp.ne.s32.totalorder %s123, %s124
      %p135 = scmp.eq.s32.totalorder %s18, 0
      %p136 = por %p134, %p135
      %p137 = scmp.ne.s32.totalorder %s123, %s124
      %p138 = scmp.eq.s32.totalorder %s19, 3
      %p139 = por %p137, %p138
      %p141 = scmp.ne.s32.totalorder %s124, %s140
      %p142 = scmp.eq.s32.totalorder %s19, 0
      %p143 = por %p141, %p142
      %s144 = ssub.s32 %s21, %s35
      %s145 = ssub.s32 %s20, %s39
      %s146 = sor.u32 %s144, %s145
      %s147 = ssub.s32 %s22, %s31
      %s148 = sor.u32 %s146, %s147
      %p149 = scmp.eq.s32.totalorder %s148, 0
      %s151 = sadd.s32 %s150, 1
      %s152 = scalar_select %p149, %s150, %s151
      %p155 = pneg %p149
      %p156 = scmp.eq.s32.totalorder %s13, 3
      %p157 = por %p155, %p156
      %p158 = scmp.ne.s32.totalorder %s150, %s153
      %p159 = scmp.eq.s32.totalorder %s13, 0
      %p160 = por %p158, %p159
      %p161 = scmp.ne.s32.totalorder %s150, %s153
      %p162 = scmp.eq.s32.totalorder %s18, 3
      %p163 = por %p161, %p162
      %p164 = scmp.ne.s32.totalorder %s153, %s154
      %p165 = scmp.eq.s32.totalorder %s18, 0
      %p166 = por %p164, %p165
      %p167 = scmp.ne.s32.totalorder %s153, %s154
      %p168 = scmp.eq.s32.totalorder %s19, 3
      %p169 = por %p167, %p168
      %p171 = scmp.ne.s32.totalorder %s154, %s170
      %p172 = scmp.eq.s32.totalorder %s19, 0
      %p173 = por %p171, %p172
      %p174 = scmp.le.s32.totalorder 1, %s13
      %p175 = scmp.lt.s32.totalorder %s13, 5
      %p176 = pnand %p174, %p175
      %p177 = pneg %p176
      // Predicated region
      $region9: #{tpu_custom_call.1} parent=5 // pred_check
        _
      $region10: #{tpu_custom_call.1} parent=5 // pred_check_branch
        %179 = sbr.rel (%p176) target = $region12
      $region11: #{tpu_custom_call.1} parent=5 // pred_region
        %s180 = ssub.s32 %s13, 1
        // Predicated region
        $region13: #{tpu_custom_call.1} parent=11 // pred_check
          %p181 = pneg %p84
        $region14: #{tpu_custom_call.1} parent=11 // pred_check_branch
          %183 = sbr.rel (%p181) target = $region16
        $region15: #{tpu_custom_call.1} parent=11 // pred_region
          %p184 = scmp.lt.s32.totalorder %s23, 0
          %s185 = scalar_select %p184, %s23, 0
          %s186 = smul.addr %s185, 4
          %s187 = scalar_lea.vmem %s1, %s186
        $region16: #{tpu_custom_call.1} parent=11 // pred_fallthru
          _
        // Predicated region
        $region17: #{tpu_custom_call.1} parent=11 // pred_check
          %p188 = pneg %p110
        $region18: #{tpu_custom_call.1} parent=11 // pred_check_branch
          %190 = sbr.rel (%p188) target = $region20
        $region19: #{tpu_custom_call.1} parent=11 // pred_region
          %p191 = scmp.lt.s32.totalorder %s23, 0
          %s192 = scalar_select %p191, %s23, 0
          %s193 = scalar_lea.vmem %s2, %s192
        $region20: #{tpu_custom_call.1} parent=11 // pred_fallthru
          _
        // Predicated region
        $region21: #{tpu_custom_call.1} parent=11 // pred_check
          %p194 = pneg %p136
        $region22: #{tpu_custom_call.1} parent=11 // pred_check_branch
          %196 = sbr.rel (%p194) target = $region24
        $region23: #{tpu_custom_call.1} parent=11 // pred_region
          %p197 = scmp.lt.s32.totalorder %s23, 0
          %s198 = scalar_select %p197, %s23, 0
          %s199 = scalar_lea.vmem %s3, %s198
        $region24: #{tpu_custom_call.1} parent=11 // pred_fallthru
          _
      $region12: #{tpu_custom_call.1} parent=5 // pred_fallthru
        _
      %p200 = scmp.lt.s32.totalorder %s13, 4
      // Predicated region
      $region25: #{tpu_custom_call.1} parent=5 // pred_check
        %p201 = pneg %p200
      $region26: #{tpu_custom_call.1} parent=5 // pred_check_branch
        %203 = sbr.rel (%p201) target = $region28
      $region27: #{tpu_custom_call.1} parent=5 // pred_region
        // Predicated region
        $region29: #{tpu_custom_call.1} parent=27 // pred_check
          %p204 = pneg %p52
        $region30: #{tpu_custom_call.1} parent=27 // pred_check_branch
          %206 = sbr.rel (%p204) target = $region32
        $region31: #{tpu_custom_call.1} parent=27 // pred_region
          %p207 = scmp.lt.s32.totalorder %s21, 1
          %s208 = scalar_select %p207, %s21, 1
          %s209 = smul.addr %s208, 54
          %s210 = smul.addr %s209, 4
          %s211 = scalar_lea.vmem %s0, %s210
        $region32: #{tpu_custom_call.1} parent=27 // pred_fallthru
          _
      $region28: #{tpu_custom_call.1} parent=5 // pred_fallthru
        _
      %p212 = scmp.le.s32.totalorder 1, %s13
      %p213 = scmp.lt.s32.totalorder %s13, 5
      %p214 = pnand %p212, %p213
      %p215 = pneg %p214
      // Predicated region
      $region33: #{tpu_custom_call.1} parent=5 // pred_check
        _
      $region34: #{tpu_custom_call.1} parent=5 // pred_check_branch
        %217 = sbr.rel (%p214) target = $region36
      $region35: #{tpu_custom_call.1} parent=5 // pred_region
        %s218 = ssub.s32 %s13, 1
        %p219 = scmp.lt.s32.totalorder %s24, 1
        %s220 = scalar_select %p219, %s24, 1
        %s221 = smul.addr %s220, 54
        %s222 = smul.addr %s221, 4
        %s223 = scalar_lea.vmem %s0, %s222
        %p224 = pneg %p58
        %p225 = pneg %p55
        %p226 = scmp.lt.s32.totalorder %s23, 0
        %s227 = scalar_select %p226, %s23, 0
        %s228 = smul.addr %s227, 4
        %s229 = scalar_lea.vmem %s1, %s228
        %p230 = pneg %p84
        %p231 = pneg %p81
        %p232 = scmp.lt.s32.totalorder %s23, 0
        %s233 = scalar_select %p232, %s23, 0
        %s234 = scalar_lea.vmem %s2, %s233
        %p235 = pneg %p110
        %p236 = pneg %p107
        %p237 = scmp.lt.s32.totalorder %s23, 0
        %s238 = scalar_select %p237, %s23, 0
        %s239 = scalar_lea.vmem %s3, %s238
        %p240 = pneg %p136
        %p241 = pneg %p133
        %p242 = pneg %p166
        %p243 = pneg %p163
        %s244 = sand.u32 %s153, 1
        %s245 = scalar_lea.sflag [#allocation3], %s244
        %s246 = sand.u32 %s153, 1
        %s247 = smul.addr %s246, 8
        %s248 = scalar_lea.vmem [#allocation2], %s247
        %p249 = scmp.lt.s32.totalorder %s24, 1
        %s250 = scalar_select %p249, %s24, 1
        %s251 = smul.addr %s250, 54
        %s252 = smul.addr %s251, 4
        %s253 = scalar_lea.vmem %s0, %s252
        %p254 = scmp.lt.s32.totalorder %s23, 0
        %s255 = scalar_select %p254, %s23, 0
        %s256 = smul.addr %s255, 4
        %s257 = scalar_lea.vmem %s1, %s256
        %p258 = scmp.lt.s32.totalorder %s23, 0
        %s259 = scalar_select %p258, %s23, 0
        %s260 = scalar_lea.vmem %s2, %s259
        %p261 = scmp.lt.s32.totalorder %s23, 0
        %s262 = scalar_select %p261, %s23, 0
        %s263 = scalar_lea.vmem %s3, %s262
        %s265 = smul.u32 %s25, 8
        %s266 = smul.u32 %s265, 3
        %s267 = smul.addr %s266, 4
        %s268 = scalar_lea.vmem %s253, %s267
        %v269 = vld [vmem:[%s268] sm:$0xf]
        %v270 = vld [vmem:[%s268 + $0x4] sm:$0xf]
        %v271 = vld [vmem:[%s268 + $0x8] sm:$0x1]
        %v272 = vld [vmem:[%s268 + $0xc] sm:$0xf]
        %v273 = vld [vmem:[%s268 + $0x10] sm:$0xf]
        %v274 = vld [vmem:[%s268 + $0x14] sm:$0x1]
        %v275 = vld [vmem:[%s268 + $0x18] sm:$0xf]
        %v276 = vld [vmem:[%s268 + $0x1c] sm:$0xf]
        %v277 = vld [vmem:[%s268 + $0x20] sm:$0x1]
        %v278 = vld [vmem:[%s268 + $0x24] sm:$0xf]
        %v279 = vld [vmem:[%s268 + $0x28] sm:$0xf]
        %v280 = vld [vmem:[%s268 + $0x2c] sm:$0x1]
        %v281 = vld [vmem:[%s268 + $0x30] sm:$0xf]
        %v282 = vld [vmem:[%s268 + $0x34] sm:$0xf]
        %v283 = vld [vmem:[%s268 + $0x38] sm:$0x1]
        %v284 = vld [vmem:[%s268 + $0x3c] sm:$0xf]
        %v285 = vld [vmem:[%s268 + $0x40] sm:$0xf]
        %v286 = vld [vmem:[%s268 + $0x44] sm:$0x1]
        %v287 = vld [vmem:[%s268 + $0x48] sm:$0xf]
        %v288 = vld [vmem:[%s268 + $0x4c] sm:$0xf]
        %v289 = vld [vmem:[%s268 + $0x50] sm:$0x1]
        %v290 = vld [vmem:[%s268 + $0x54] sm:$0xf]
        %v291 = vld [vmem:[%s268 + $0x58] sm:$0xf]
        %v292 = vld [vmem:[%s268 + $0x5c] sm:$0x1]
        %v293 = vld [vmem:[%s268 + $0x60] sm:$0xf]
        %v294 = vld [vmem:[%s268 + $0x64] sm:$0xf]
        %v295 = vld [vmem:[%s268 + $0x68] sm:$0x1]
        %v296 = vld [vmem:[%s268 + $0x6c] sm:$0xf]
        %v297 = vld [vmem:[%s268 + $0x70] sm:$0xf]
        %v298 = vld [vmem:[%s268 + $0x74] sm:$0x1]
        %v315 = vunpack.c.l.b16 %v269
        %v316 = vunpack.c.l.b16 %v270
        %v317 = vunpack.c.l.b16 %v272
        %v318 = vunpack.c.l.b16 %v273
        %v319 = vunpack.c.l.b16 %v275
        %v320 = vunpack.c.l.b16 %v276
        %v321 = vunpack.c.l.b16 %v278
        %v322 = vunpack.c.l.b16 %v279
        %v323 = vunpack.c.l.b16 %v281
        %v324 = vunpack.c.l.b16 %v282
        %v325 = vunpack.c.l.b16 %v284
        %v326 = vunpack.c.l.b16 %v285
        %v327 = vunpack.c.l.b16 %v287
        %v328 = vunpack.c.l.b16 %v288
        %v329 = vunpack.c.l.b16 %v290
        %v330 = vunpack.c.l.b16 %v291
        %v331 = vpack.c.b16 %v316, %v315
        %v332 = vpack.c.b16 %v318, %v317
        %v333 = vpack.c.b16 %v320, %v319
        %v334 = vpack.c.b16 %v322, %v321
        %v335 = vpack.c.b16 %v324, %v323
        %v336 = vpack.c.b16 %v326, %v325
        %v337 = vpack.c.b16 %v328, %v327
        %v338 = vpack.c.b16 %v330, %v329
        %v347 = vunpack.c.l.b16 %v271
        %v348 = vunpack.c.l.b16 %v274
        %v349 = vunpack.c.l.b16 %v277
        %v350 = vunpack.c.l.b16 %v280
        %v351 = vunpack.c.l.b16 %v283
        %v352 = vunpack.c.l.b16 %v286
        %v353 = vunpack.c.l.b16 %v289
        %v354 = vunpack.c.l.b16 %v292
        %v355 = vpack.c.b16 %v347, %v347
        %v356 = vpack.c.b16 %v348, %v348
        %v357 = vpack.c.b16 %v349, %v349
        %v358 = vpack.c.b16 %v350, %v350
        %v359 = vpack.c.b16 %v351, %v351
        %v360 = vpack.c.b16 %v352, %v352
        %v361 = vpack.c.b16 %v353, %v353
        %v362 = vpack.c.b16 %v354, %v354
        %vm363 = vsmask.f32 7424
        %v365 = vshrl.u32 %v331, 16
        %v367 = vshll.u32 %v331, 16
        %v369 = vrot.slane %v367, 1
        %v370 = vor.u32 %v365, %v369
        %v372 = vshll.u32 %v355, 16
        %v374 = vrot.slane %v372, 1
        %v375 = vsel %vm363, %v370, %v374
        %v377 = vshrl.u32 %v332, 16
        %v379 = vshll.u32 %v332, 16
        %v381 = vrot.slane %v379, 1
        %v382 = vor.u32 %v377, %v381
        %v384 = vshll.u32 %v356, 16
        %v386 = vrot.slane %v384, 1
        %v387 = vsel %vm363, %v382, %v386
        %v389 = vshrl.u32 %v333, 16
        %v391 = vshll.u32 %v333, 16
        %v393 = vrot.slane %v391, 1
        %v394 = vor.u32 %v389, %v393
        %v396 = vshll.u32 %v357, 16
        %v398 = vrot.slane %v396, 1
        %v399 = vsel %vm363, %v394, %v398
        %v401 = vshrl.u32 %v334, 16
        %v403 = vshll.u32 %v334, 16
        %v405 = vrot.slane %v403, 1
        %v406 = vor.u32 %v401, %v405
        %v408 = vshll.u32 %v358, 16
        %v410 = vrot.slane %v408, 1
        %v411 = vsel %vm363, %v406, %v410
        %v413 = vshrl.u32 %v335, 16
        %v415 = vshll.u32 %v335, 16
        %v417 = vrot.slane %v415, 1
        %v418 = vor.u32 %v413, %v417
        %v420 = vshll.u32 %v359, 16
        %v422 = vrot.slane %v420, 1
        %v423 = vsel %vm363, %v418, %v422
        %v425 = vshrl.u32 %v336, 16
        %v427 = vshll.u32 %v336, 16
        %v429 = vrot.slane %v427, 1
        %v430 = vor.u32 %v425, %v429
        %v432 = vshll.u32 %v360, 16
        %v434 = vrot.slane %v432, 1
        %v435 = vsel %vm363, %v430, %v434
        %v437 = vshrl.u32 %v337, 16
        %v439 = vshll.u32 %v337, 16
        %v441 = vrot.slane %v439, 1
        %v442 = vor.u32 %v437, %v441
        %v444 = vshll.u32 %v361, 16
        %v446 = vrot.slane %v444, 1
        %v447 = vsel %vm363, %v442, %v446
        %v449 = vshrl.u32 %v338, 16
        %v451 = vshll.u32 %v338, 16
        %v453 = vrot.slane %v451, 1
        %v454 = vor.u32 %v449, %v453
        %v456 = vshll.u32 %v362, 16
        %v458 = vrot.slane %v456, 1
        %v459 = vsel %vm363, %v454, %v458
        %460 = vrot.lane.b32.xlu0 %v375, 4
        %v461 = vpop.permute.xlu0 %460
        %462 = vrot.lane.b32.xlu0 %v387, 4
        %v463 = vpop.permute.xlu0 %462
        %464 = vrot.lane.b32.xlu0 %v399, 4
        %v465 = vpop.permute.xlu0 %464
        %466 = vrot.lane.b32.xlu0 %v411, 4
        %v467 = vpop.permute.xlu0 %466
        %468 = vrot.lane.b32.xlu0 %v423, 4
        %v469 = vpop.permute.xlu0 %468
        %470 = vrot.lane.b32.xlu0 %v435, 4
        %v471 = vpop.permute.xlu0 %470
        %472 = vrot.lane.b32.xlu0 %v447, 4
        %v473 = vpop.permute.xlu0 %472
        %474 = vrot.lane.b32.xlu0 %v459, 4
        %v475 = vpop.permute.xlu0 %474
        %vm476 = vcmask 1046528
        %v477 = vrot.slane %v331, 1
        %v478 = vrot.slane %v355, 1
        %v479 = vsel %vm476, %v477, %v478
        %v480 = vrot.slane %v332, 1
        %v481 = vrot.slane %v356, 1
        %v482 = vsel %vm476, %v480, %v481
        %v483 = vrot.slane %v333, 1
        %v484 = vrot.slane %v357, 1
        %v485 = vsel %vm476, %v483, %v484
        %v486 = vrot.slane %v334, 1
        %v487 = vrot.slane %v358, 1
        %v488 = vsel %vm476, %v486, %v487
        %v489 = vrot.slane %v335, 1
        %v490 = vrot.slane %v359, 1
        %v491 = vsel %vm476, %v489, %v490
        %v492 = vrot.slane %v336, 1
        %v493 = vrot.slane %v360, 1
        %v494 = vsel %vm476, %v492, %v493
        %v495 = vrot.slane %v337, 1
        %v496 = vrot.slane %v361, 1
        %v497 = vsel %vm476, %v495, %v496
        %v498 = vrot.slane %v338, 1
        %v499 = vrot.slane %v362, 1
        %v500 = vsel %vm476, %v498, %v499
        %501 = vrot.lane.b32.xlu0 %v479, 8
        %v502 = vpop.permute.xlu0 %501
        %503 = vrot.lane.b32.xlu0 %v482, 8
        %v504 = vpop.permute.xlu0 %503
        %505 = vrot.lane.b32.xlu0 %v485, 8
        %v506 = vpop.permute.xlu0 %505
        %507 = vrot.lane.b32.xlu0 %v488, 8
        %v508 = vpop.permute.xlu0 %507
        %509 = vrot.lane.b32.xlu0 %v491, 8
        %v510 = vpop.permute.xlu0 %509
        %511 = vrot.lane.b32.xlu0 %v494, 8
        %v512 = vpop.permute.xlu0 %511
        %513 = vrot.lane.b32.xlu0 %v497, 8
        %v514 = vpop.permute.xlu0 %513
        %515 = vrot.lane.b32.xlu0 %v500, 8
        %v516 = vpop.permute.xlu0 %515
        %v519 = vunpack.c.l.b16 %v293
        %v520 = vunpack.c.l.b16 %v294
        %v521 = vpack.c.b16 %v520, %v519
        %522 = vrot.lane.b32.xlu0 %v332, 12
        %v523 = vpop.permute.xlu0 %522
        %524 = vrot.lane.b32.xlu0 %v333, 12
        %v525 = vpop.permute.xlu0 %524
        %526 = vrot.lane.b32.xlu0 %v334, 12
        %v527 = vpop.permute.xlu0 %526
        %528 = vrot.lane.b32.xlu0 %v335, 12
        %v529 = vpop.permute.xlu0 %528
        %530 = vrot.lane.b32.xlu0 %v336, 12
        %v531 = vpop.permute.xlu0 %530
        %532 = vrot.lane.b32.xlu0 %v337, 12
        %v533 = vpop.permute.xlu0 %532
        %534 = vrot.lane.b32.xlu0 %v338, 12
        %v535 = vpop.permute.xlu0 %534
        %536 = vrot.lane.b32.xlu0 %v521, 12
        %v537 = vpop.permute.xlu0 %536
        %v539 = vunpack.c.l.b16 %v295
        %v540 = vpack.c.b16 %v539, %v539
        %v542 = vshrl.u32 %v521, 16
        %v544 = vshll.u32 %v521, 16
        %v546 = vrot.slane %v544, 1
        %v547 = vor.u32 %v542, %v546
        %v549 = vshll.u32 %v540, 16
        %v551 = vrot.slane %v549, 1
        %v552 = vsel %vm363, %v547, %v551
        %553 = vrot.lane.b32.xlu0 %v387, 16
        %v554 = vpop.permute.xlu0 %553
        %555 = vrot.lane.b32.xlu0 %v399, 16
        %v556 = vpop.permute.xlu0 %555
        %557 = vrot.lane.b32.xlu0 %v411, 16
        %v558 = vpop.permute.xlu0 %557
        %559 = vrot.lane.b32.xlu0 %v423, 16
        %v560 = vpop.permute.xlu0 %559
        %561 = vrot.lane.b32.xlu0 %v435, 16
        %v562 = vpop.permute.xlu0 %561
        %563 = vrot.lane.b32.xlu0 %v447, 16
        %v564 = vpop.permute.xlu0 %563
        %565 = vrot.lane.b32.xlu0 %v459, 16
        %v566 = vpop.permute.xlu0 %565
        %567 = vrot.lane.b32.xlu0 %v552, 16
        %v568 = vpop.permute.xlu0 %567
        %v569 = vrot.slane %v521, 1
        %v570 = vrot.slane %v540, 1
        %v571 = vsel %vm476, %v569, %v570
        %572 = vrot.lane.b32.xlu0 %v482, 20
        %v573 = vpop.permute.xlu0 %572
        %574 = vrot.lane.b32.xlu0 %v485, 20
        %v575 = vpop.permute.xlu0 %574
        %576 = vrot.lane.b32.xlu0 %v488, 20
        %v577 = vpop.permute.xlu0 %576
        %578 = vrot.lane.b32.xlu0 %v491, 20
        %v579 = vpop.permute.xlu0 %578
        %580 = vrot.lane.b32.xlu0 %v494, 20
        %v581 = vpop.permute.xlu0 %580
        %582 = vrot.lane.b32.xlu0 %v497, 20
        %v583 = vpop.permute.xlu0 %582
        %584 = vrot.lane.b32.xlu0 %v500, 20
        %v585 = vpop.permute.xlu0 %584
        %586 = vrot.lane.b32.xlu0 %v571, 20
        %v587 = vpop.permute.xlu0 %586
        %v590 = vunpack.c.l.b16 %v296
        %v591 = vunpack.c.l.b16 %v297
        %v592 = vpack.c.b16 %v591, %v590
        %593 = vrot.lane.b32.xlu0 %v333, 24
        %v594 = vpop.permute.xlu0 %593
        %595 = vrot.lane.b32.xlu0 %v334, 24
        %v596 = vpop.permute.xlu0 %595
        %597 = vrot.lane.b32.xlu0 %v335, 24
        %v598 = vpop.permute.xlu0 %597
        %599 = vrot.lane.b32.xlu0 %v336, 24
        %v600 = vpop.permute.xlu0 %599
        %601 = vrot.lane.b32.xlu0 %v337, 24
        %v602 = vpop.permute.xlu0 %601
        %603 = vrot.lane.b32.xlu0 %v338, 24
        %v604 = vpop.permute.xlu0 %603
        %605 = vrot.lane.b32.xlu0 %v521, 24
        %v606 = vpop.permute.xlu0 %605
        %607 = vrot.lane.b32.xlu0 %v592, 24
        %v608 = vpop.permute.xlu0 %607
        %v610 = vunpack.c.l.b16 %v298
        %v611 = vpack.c.b16 %v610, %v610
        %v613 = vshrl.u32 %v592, 16
        %v615 = vshll.u32 %v592, 16
        %v617 = vrot.slane %v615, 1
        %v618 = vor.u32 %v613, %v617
        %v620 = vshll.u32 %v611, 16
        %v622 = vrot.slane %v620, 1
        %v623 = vsel %vm363, %v618, %v622
        %624 = vrot.lane.b32.xlu0 %v399, 28
        %v625 = vpop.permute.xlu0 %624
        %626 = vrot.lane.b32.xlu0 %v411, 28
        %v627 = vpop.permute.xlu0 %626
        %628 = vrot.lane.b32.xlu0 %v423, 28
        %v629 = vpop.permute.xlu0 %628
        %630 = vrot.lane.b32.xlu0 %v435, 28
        %v631 = vpop.permute.xlu0 %630
        %632 = vrot.lane.b32.xlu0 %v447, 28
        %v633 = vpop.permute.xlu0 %632
        %634 = vrot.lane.b32.xlu0 %v459, 28
        %v635 = vpop.permute.xlu0 %634
        %636 = vrot.lane.b32.xlu0 %v552, 28
        %v637 = vpop.permute.xlu0 %636
        %638 = vrot.lane.b32.xlu0 %v623, 28
        %v639 = vpop.permute.xlu0 %638
        %v640 = vrot.slane %v592, 1
        %v641 = vrot.slane %v611, 1
        %v642 = vsel %vm476, %v640, %v641
        %643 = vrot.lane.b32.xlu0 %v485, 32
        %v644 = vpop.permute.xlu0 %643
        %645 = vrot.lane.b32.xlu0 %v488, 32
        %v646 = vpop.permute.xlu0 %645
        %647 = vrot.lane.b32.xlu0 %v491, 32
        %v648 = vpop.permute.xlu0 %647
        %649 = vrot.lane.b32.xlu0 %v494, 32
        %v650 = vpop.permute.xlu0 %649
        %651 = vrot.lane.b32.xlu0 %v497, 32
        %v652 = vpop.permute.xlu0 %651
        %653 = vrot.lane.b32.xlu0 %v500, 32
        %v654 = vpop.permute.xlu0 %653
        %655 = vrot.lane.b32.xlu0 %v571, 32
        %v656 = vpop.permute.xlu0 %655
        %657 = vrot.lane.b32.xlu0 %v642, 32
        %v658 = vpop.permute.xlu0 %657
        %vm659 = vcmask 31744
        %v661 = vsel %vm659, %v331, %v461
        %v663 = vsel %vm659, %v332, %v463
        %v665 = vsel %vm659, %v333, %v465
        %v667 = vsel %vm659, %v334, %v467
        %v669 = vsel %vm659, %v335, %v469
        %v671 = vsel %vm659, %v336, %v471
        %v673 = vsel %vm659, %v337, %v473
        %v675 = vsel %vm659, %v338, %v475
        %vm676 = vcmask 64512
        %v678 = vsel %vm676, %v661, %v502
        %v680 = vsel %vm676, %v663, %v504
        %v682 = vsel %vm676, %v665, %v506
        %v684 = vsel %vm676, %v667, %v508
        %v686 = vsel %vm676, %v669, %v510
        %v688 = vsel %vm676, %v671, %v512
        %v690 = vsel %vm676, %v673, %v514
        %v692 = vsel %vm676, %v675, %v516
        %vm693 = vcmask 97280
        %v695 = vsel %vm693, %v678, %v523
        %v697 = vsel %vm693, %v680, %v525
        %v699 = vsel %vm693, %v682, %v527
        %v701 = vsel %vm693, %v684, %v529
        %v703 = vsel %vm693, %v686, %v531
        %v705 = vsel %vm693, %v688, %v533
        %v707 = vsel %vm693, %v690, %v535
        %v709 = vsel %vm693, %v692, %v537
        %vm710 = vcmask 130048
        %v712 = vsel %vm710, %v695, %v554
        %v714 = vsel %vm710, %v697, %v556
        %v716 = vsel %vm710, %v699, %v558
        %v718 = vsel %vm710, %v701, %v560
        %v720 = vsel %vm710, %v703, %v562
        %v722 = vsel %vm710, %v705, %v564
        %v724 = vsel %vm710, %v707, %v566
        %v726 = vsel %vm710, %v709, %v568
        %vm727 = vcmask 162816
        %v729 = vsel %vm727, %v712, %v573
        %v731 = vsel %vm727, %v714, %v575
        %v733 = vsel %vm727, %v716, %v577
        %v735 = vsel %vm727, %v718, %v579
        %v737 = vsel %vm727, %v720, %v581
        %v739 = vsel %vm727, %v722, %v583
        %v741 = vsel %vm727, %v724, %v585
        %v743 = vsel %vm727, %v726, %v587
        %vm744 = vcmask 195584
        %v746 = vsel %vm744, %v729, %v594
        %v748 = vsel %vm744, %v731, %v596
        %v750 = vsel %vm744, %v733, %v598
        %v752 = vsel %vm744, %v735, %v600
        %v754 = vsel %vm744, %v737, %v602
        %v756 = vsel %vm744, %v739, %v604
        %v758 = vsel %vm744, %v741, %v606
        %v760 = vsel %vm744, %v743, %v608
        %vm761 = vcmask 228352
        %v763 = vsel %vm761, %v746, %v625
        %v765 = vsel %vm761, %v748, %v627
        %v767 = vsel %vm761, %v750, %v629
        %v769 = vsel %vm761, %v752, %v631
        %v771 = vsel %vm761, %v754, %v633
        %v773 = vsel %vm761, %v756, %v635
        %v775 = vsel %vm761, %v758, %v637
        %v777 = vsel %vm761, %v760, %v639
        %vm778 = vcmask 261120
        %v780 = vsel %vm778, %v763, %v644
        %v782 = vsel %vm778, %v765, %v646
        %v784 = vsel %vm778, %v767, %v648
        %v786 = vsel %vm778, %v769, %v650
        %v788 = vsel %vm778, %v771, %v652
        %v790 = vsel %vm778, %v773, %v654
        %v792 = vsel %vm778, %v775, %v656
        %v794 = vsel %vm778, %v777, %v658
        %vm795 = vcmask 293888
        %v797 = vsel %vm795, %v780, 0
        %v799 = vsel %vm795, %v782, 0
        %v801 = vsel %vm795, %v784, 0
        %v803 = vsel %vm795, %v786, 0
        %v805 = vsel %vm795, %v788, 0
        %v807 = vsel %vm795, %v790, 0
        %v809 = vsel %vm795, %v792, 0
        %v811 = vsel %vm795, %v794, 0
        %v813 = vld [vmem:[%s257] sm:$0xf]
        %v814 = vld [vmem:[%s257 + $0x4] sm:$0xf]
        %v815 = vld [vmem:[%s257 + $0x8] sm:$0xf]
        %v816 = vld [vmem:[%s257 + $0xc] sm:$0xf]
        %v817 = vld [vmem:[%s257 + $0x10] sm:$0xf]
        %v818 = vld [vmem:[%s257 + $0x14] sm:$0xf]
        %v819 = vld [vmem:[%s257 + $0x18] sm:$0xf]
        %v820 = vld [vmem:[%s257 + $0x1c] sm:$0xf]
        %v821 = vld [vmem:[%s257 + $0x20] sm:$0xf]
        %v822 = vld [vmem:[%s257 + $0x24] sm:$0xf]
        %v823 = vld [vmem:[%s257 + $0x28] sm:$0xf]
        %v824 = vld [vmem:[%s257 + $0x2c] sm:$0xf]
        %v825 = vld [vmem:[%s257 + $0x30] sm:$0xf]
        %v826 = vld [vmem:[%s257 + $0x34] sm:$0xf]
        %v827 = vld [vmem:[%s257 + $0x38] sm:$0xf]
        %v828 = vld [vmem:[%s257 + $0x3c] sm:$0xf]
        %v845 = vunpack.c.l.b16 %v813
        %v846 = vunpack.c.l.b16 %v814
        %v847 = vunpack.c.l.b16 %v815
        %v848 = vunpack.c.l.b16 %v816
        %v849 = vunpack.c.l.b16 %v817
        %v850 = vunpack.c.l.b16 %v818
        %v851 = vunpack.c.l.b16 %v819
        %v852 = vunpack.c.l.b16 %v820
        %v853 = vunpack.c.l.b16 %v821
        %v854 = vunpack.c.l.b16 %v822
        %v855 = vunpack.c.l.b16 %v823
        %v856 = vunpack.c.l.b16 %v824
        %v857 = vunpack.c.l.b16 %v825
        %v858 = vunpack.c.l.b16 %v826
        %v859 = vunpack.c.l.b16 %v827
        %v860 = vunpack.c.l.b16 %v828
        %v861 = vpack.c.b16 %v846, %v845
        %v862 = vpack.c.b16 %v848, %v847
        %v863 = vpack.c.b16 %v850, %v849
        %v864 = vpack.c.b16 %v852, %v851
        %v865 = vpack.c.b16 %v854, %v853
        %v866 = vpack.c.b16 %v856, %v855
        %v867 = vpack.c.b16 %v858, %v857
        %v868 = vpack.c.b16 %v860, %v859
        %877 = vmatprep.subr.bf16.mxu0 0
        %878 = vmatpush1.bf16.msra.mxu0 %v861
        %879 = vmatprep.subr.bf16.mxu0 0
        %880 = vmatpush1.bf16.msra.mxu0 %v862
        %881 = vmatprep.subr.bf16.mxu0 0
        %882 = vmatpush1.bf16.msra.mxu0 %v863
        %883 = vmatprep.subr.bf16.mxu0 0
        %884 = vmatpush1.bf16.msra.mxu0 %v864
        %885 = vmatprep.subr.bf16.mxu0 0
        %886 = vmatpush1.bf16.msra.mxu0 %v865
        %887 = vmatprep.subr.bf16.mxu0 0
        %888 = vmatpush1.bf16.msra.mxu0 %v866
        %889 = vmatprep.subr.bf16.mxu0 0
        %890 = vmatpush1.bf16.msra.mxu0 %v867
        %891 = vmatprep.subr.bf16.mxu0 0
        %892 = vmatpush1.bf16.msra.mxu0 %v868
        %893 = vmatprep.subr.bf16.mxu0 0
        %894 = vmatpush1.bf16.msra.mxu0 0
        %895 = vmatprep.subr.bf16.mxu0 0
        %896 = vmatpush1.bf16.msra.mxu0 0
        %897 = vmatprep.subr.bf16.mxu0 0
        %898 = vmatpush1.bf16.msra.mxu0 0
        %899 = vmatprep.subr.bf16.mxu0 0
        %900 = vmatpush1.bf16.msra.mxu0 0
        %901 = vmatprep.subr.bf16.mxu0 0
        %902 = vmatpush1.bf16.msra.mxu0 0
        %903 = vmatprep.subr.bf16.mxu0 0
        %904 = vmatpush1.bf16.msra.mxu0 0
        %905 = vmatprep.subr.bf16.mxu0 0
        %906 = vmatpush1.bf16.msra.mxu0 0
        %907 = vmatprep.subr.bf16.mxu0 0
        %908 = vmatpush1.bf16.msra.mxu0 0
        %909 = vmatprep.mubr.bf16.mxu0 0
        %910 = vmatmul.mubr.bf16.gmra.mrb[0].mxu0 %v797
        %v911 = vpop.f32.mrb[0].mxu0
        %v912 = vadd.f32 0.0, %v911
        %v913 = vpop.f32.mrb[0].mxu0
        %v914 = vpop.f32.mrb[0].mxu0
        %v915 = vadd.f32 0.0, %v914
        %v916 = vpop.f32.mrb[0].mxu0
        %917 = vmatprep.mubr.bf16.mxu0 0
        %918 = vmatmul.mubr.bf16.gmra.mrb[0].mxu0 %v799
        %v919 = vpop.f32.mrb[0].mxu0
        %v920 = vadd.f32 0.0, %v919
        %v921 = vpop.f32.mrb[0].mxu0
        %v922 = vpop.f32.mrb[0].mxu0
        %v923 = vadd.f32 0.0, %v922
        %v924 = vpop.f32.mrb[0].mxu0
        %925 = vmatprep.mubr.bf16.mxu0 0
        %926 = vmatmul.mubr.bf16.gmra.mrb[0].mxu0 %v801
        %v927 = vpop.f32.mrb[0].mxu0
        %v928 = vadd.f32 0.0, %v927
        %v929 = vpop.f32.mrb[0].mxu0
        %v930 = vpop.f32.mrb[0].mxu0
        %v931 = vadd.f32 0.0, %v930
        %v932 = vpop.f32.mrb[0].mxu0
        %933 = vmatprep.mubr.bf16.mxu0 0
        %934 = vmatmul.mubr.bf16.gmra.mrb[0].mxu0 %v803
        %v935 = vpop.f32.mrb[0].mxu0
        %v936 = vadd.f32 0.0, %v935
        %v937 = vpop.f32.mrb[0].mxu0
        %v938 = vpop.f32.mrb[0].mxu0
        %v939 = vadd.f32 0.0, %v938
        %v940 = vpop.f32.mrb[0].mxu0
        %941 = vmatprep.mubr.bf16.mxu0 0
        %942 = vmatmul.mubr.bf16.gmra.mrb[0].mxu0 %v805
        %v943 = vpop.f32.mrb[0].mxu0
        %v944 = vadd.f32 0.0, %v943
        %v945 = vpop.f32.mrb[0].mxu0
        %v946 = vpop.f32.mrb[0].mxu0
        %v947 = vadd.f32 0.0, %v946
        %v948 = vpop.f32.mrb[0].mxu0
        %949 = vmatprep.mubr.bf16.mxu0 0
        %950 = vmatmul.mubr.bf16.gmra.mrb[0].mxu0 %v807
        %v951 = vpop.f32.mrb[0].mxu0
        %v952 = vadd.f32 0.0, %v951
        %v953 = vpop.f32.mrb[0].mxu0
        %v954 = vpop.f32.mrb[0].mxu0
        %v955 = vadd.f32 0.0, %v954
        %v956 = vpop.f32.mrb[0].mxu0
        %957 = vmatprep.mubr.bf16.mxu0 0
        %958 = vmatmul.mubr.bf16.gmra.mrb[0].mxu0 %v809
        %v959 = vpop.f32.mrb[0].mxu0
        %v960 = vadd.f32 0.0, %v959
        %v961 = vpop.f32.mrb[0].mxu0
        %v962 = vpop.f32.mrb[0].mxu0
        %v963 = vadd.f32 0.0, %v962
        %v964 = vpop.f32.mrb[0].mxu0
        %965 = vmatprep.mubr.bf16.mxu0 0
        %966 = vmatmul.mubr.bf16.gmra.mrb[0].mxu0 %v811
        %v967 = vpop.f32.mrb[0].mxu0
        %v968 = vadd.f32 0.0, %v967
        %v969 = vpop.f32.mrb[0].mxu0
        %v970 = vpop.f32.mrb[0].mxu0
        %v971 = vadd.f32 0.0, %v970
        %v972 = vpop.f32.mrb[0].mxu0
        %973 = vdwg.mxu0
        %v974 = vld [vmem:[%s260] sm:$0x1]
        %v976 = vlaneseq
        %v977 = vshrl.u32 %v976, 7
        %v978 = vsub.s32 0, %v977
        %v979 = vrot.slane %v974, %v978
        %v981 = vmul.f32 %v912, %v979
        %v982 = vmul.f32 %v915, %v979
        %v983 = vmul.f32 %v920, %v979
        %v984 = vmul.f32 %v923, %v979
        %v985 = vmul.f32 %v928, %v979
        %v986 = vmul.f32 %v931, %v979
        %v987 = vmul.f32 %v936, %v979
        %v988 = vmul.f32 %v939, %v979
        %v989 = vmul.f32 %v944, %v979
        %v990 = vmul.f32 %v947, %v979
        %v991 = vmul.f32 %v952, %v979
        %v992 = vmul.f32 %v955, %v979
        %v993 = vmul.f32 %v960, %v979
        %v994 = vmul.f32 %v963, %v979
        %v995 = vmul.f32 %v968, %v979
        %v996 = vmul.f32 %v971, %v979
        %v997 = vld [vmem:[%s263] sm:$0x1]
        %v999 = vlaneseq
        %v1000 = vshrl.u32 %v999, 7
        %v1001 = vsub.s32 0, %v1000
        %v1002 = vrot.slane %v997, %v1001
        %v1004 = vadd.f32 %v981, %v1002
        %v1005 = vadd.f32 %v982, %v1002
        %v1006 = vadd.f32 %v983, %v1002
        %v1007 = vadd.f32 %v984, %v1002
        %v1008 = vadd.f32 %v985, %v1002
        %v1009 = vadd.f32 %v986, %v1002
        %v1010 = vadd.f32 %v987, %v1002
        %v1011 = vadd.f32 %v988, %v1002
        %v1012 = vadd.f32 %v989, %v1002
        %v1013 = vadd.f32 %v990, %v1002
        %v1014 = vadd.f32 %v991, %v1002
        %v1015 = vadd.f32 %v992, %v1002
        %v1016 = vadd.f32 %v993, %v1002
        %v1017 = vadd.f32 %v994, %v1002
        %v1018 = vadd.f32 %v995, %v1002
        %v1019 = vadd.f32 %v996, %v1002
        %v1020 = vmax.f32 %v1004, 0.0
        %v1021 = vmax.f32 %v1005, 0.0
        %v1022 = vmax.f32 %v1006, 0.0
        %v1023 = vmax.f32 %v1007, 0.0
        %v1024 = vmax.f32 %v1008, 0.0
        %v1025 = vmax.f32 %v1009, 0.0
        %v1026 = vmax.f32 %v1010, 0.0
        %v1027 = vmax.f32 %v1011, 0.0
        %v1028 = vmax.f32 %v1012, 0.0
        %v1029 = vmax.f32 %v1013, 0.0
        %v1030 = vmax.f32 %v1014, 0.0
        %v1031 = vmax.f32 %v1015, 0.0
        %v1032 = vmax.f32 %v1016, 0.0
        %v1033 = vmax.f32 %v1017, 0.0
        %v1034 = vmax.f32 %v1018, 0.0
        %v1035 = vmax.f32 %v1019, 0.0
        %1036 = vxpose.xlu0.b32.start [1/16] %v1020, 128
        %1037 = vxpose.xlu0.b32.cont [2/16] %v1021, 128
        %1038 = vxpose.xlu0.b32.cont [3/16] %v1022, 128
        %1039 = vxpose.xlu0.b32.cont [4/16] %v1023, 128
        %1040 = vxpose.xlu0.b32.cont [5/16] %v1024, 128
        %1041 = vxpose.xlu0.b32.cont [6/16] %v1025, 128
        %1042 = vxpose.xlu0.b32.cont [7/16] %v1026, 128
        %1043 = vxpose.xlu0.b32.cont [8/16] %v1027, 128
        %1044 = vxpose.xlu0.b32.cont [9/16] %v1028, 128
        %1045 = vxpose.xlu0.b32.cont [10/16] %v1029, 128
        %1046 = vxpose.xlu0.b32.cont [11/16] %v1030, 128
        %1047 = vxpose.xlu0.b32.cont [12/16] %v1031, 128
        %1048 = vxpose.xlu0.b32.cont [13/16] %v1032, 128
        %1049 = vxpose.xlu0.b32.cont [14/16] %v1033, 128
        %1050 = vxpose.xlu0.b32.cont [15/16] %v1034, 128
        %1051 = vxpose.xlu0.b32.end [16/16] %v1035, 128
        %v1052 = vpop.trf.xlu0
        %v1053 = vpop.trf.xlu0
        %v1054 = vpop.trf.xlu0
        %v1055 = vpop.trf.xlu0
        %v1056 = vpop.trf.xlu0
        %v1057 = vpop.trf.xlu0
        %v1058 = vpop.trf.xlu0
        %v1059 = vpop.trf.xlu0
        %v1060 = vpop.trf.xlu0
        %v1061 = vpop.trf.xlu0
        %v1062 = vpop.trf.xlu0
        %v1063 = vpop.trf.xlu0
        %v1064 = vpop.trf.xlu0
        %v1065 = vpop.trf.xlu0
        %v1066 = vpop.trf.xlu0
        %v1067 = vpop.trf.xlu0
        %1068 = vst [vmem:[%s248] sm:$0xff] %v1052
        %s1069 = sand.u32 %s153, 1
        %s1070 = scalar_lea.sflag [#allocation3], %s1069
        %s1071 = sand.u32 %s153, 1
        %s1072 = smul.addr %s1071, 8
        %s1073 = scalar_lea.vmem [#allocation2], %s1072
        // Predicated region
        $region37: #{tpu_custom_call.1} parent=35 // pred_check
          %p1074 = pneg %p163
        $region38: #{tpu_custom_call.1} parent=35 // pred_check_branch
          %1076 = sbr.rel (%p1074) target = $region40
        $region39: #{tpu_custom_call.1} parent=35 // pred_region
          %s1078 = ssub.s32 128, 128
          %1079 = vsyncadd %s1070, %s1078
          %s1080 = smul.addr %s23, 2
          %s1081 = sadd.s32 %s25, %s1080
          %s1082 = smul.addr %s24, 2
          %s1083 = sadd.s32 %s1081, %s1082
          %s1084 = smul.addr %s1083, 128
          %s1085 = scalar_lea.hbm %s4, %s1084
          %s1087 = sshll.u32 %s1073, 4
          %s1088 = int_to_ptr.vmem [resolvable:$true] %s1087
          %1090 = dma.vmem_to_hbm [thread:$0]  %s1088, 128, %s1085, %s1070
        $region40: #{tpu_custom_call.1} parent=35 // pred_fallthru
          _
      $region36: #{tpu_custom_call.1} parent=5 // pred_fallthru
        _
      %p1091 = scmp.le.s32.totalorder 2, %s13
      // Predicated region
      $region41: #{tpu_custom_call.1} parent=5 // pred_check
        %p1092 = pneg %p1091
      $region42: #{tpu_custom_call.1} parent=5 // pred_check_branch
        %1094 = sbr.rel (%p1092) target = $region44
      $region43: #{tpu_custom_call.1} parent=5 // pred_region
        %s1095 = ssub.s32 %s13, 2
        // Predicated region
        $region45: #{tpu_custom_call.1} parent=43 // pred_check
          %p1096 = pneg %p169
        $region46: #{tpu_custom_call.1} parent=43 // pred_check_branch
          %1098 = sbr.rel (%p1096) target = $region48
        $region47: #{tpu_custom_call.1} parent=43 // pred_region
          %s1099 = sand.u32 %s154, 1
          %s1100 = scalar_lea.sflag [#allocation3], %s1099
          %s1101 = sand.u32 %s154, 1
          %s1102 = smul.addr %s1101, 8
          %s1103 = scalar_lea.vmem [#allocation2], %s1102
          %1104 = dma.done %s1100, 128
        $region48: #{tpu_custom_call.1} parent=43 // pred_fallthru
          _
      $region44: #{tpu_custom_call.1} parent=5 // pred_fallthru
        _
    $region6: #{tpu_custom_call.1} parent=1 // loop_footer
      %s17 = sadd.s32 1, %s13
    $region7: #{tpu_custom_call.1} parent=1 // loop_footer_branch
      %12 = sbr.rel target = $region3
    $region8: #{tpu_custom_call.1} parent=1 // loop_exit
      _
    %1105 = vsyncpa [#allocation3], 1
    %s1106 = scalar_lea.sflag [#allocation3], 1
    %1107 = vsyncpa %s1106, 1

</llo_original>
